<compile_context>
chip_gen: v5e
topology: v5e:2x2
jax: 0.10.0
libtpu: 0.0.40
codegen_flags: <defaults>
</compile_context>

<pallas_src>
import functools

import jax
import jax.numpy as jnp
from jax import lax
from jax.experimental import pallas as pl
from jax.experimental.pallas import tpu as pltpu

_TAPS = tuple((dy, dx) for dy in range(3) for dx in range(3))  # tap index = dy*3 + dx


# ---------------------------------------------------------------------------
# Fused StudentNet cascade: conv3x3(1->C)+ReLU -> conv3x3(C->C)+ReLU -> conv3x3(C->1)
# Channel-major, flattened padded spatial, one row tile of TH output rows per grid step.
# ---------------------------------------------------------------------------
def _student_kernel(x_ref, cmask_ref, w1_ref, b1_ref, w2_ref, b2_ref, w3_ref, b3_ref,
                    o_ref,
                    pad_ref, xq_ref, col1_ref, h1_ref, col2_ref, h2_ref,
                    *, H, W, C, TH):
    # x_ref    : (1, H, W)      one batch element (resident across row tiles)
    # cmask_ref: (1, L1)        1.0 at valid (interior) padded columns, 0.0 at pad columns
    # w1_ref   : (C, 9) f32     conv1 weights,   w1t[c, t]        = w1_hwio[dy, dx, 0, c]
    # w2_ref   : (C, 9C) bf16   conv2 weights,   w2t[co, t*C+ci]  = w2_hwio[dy, dx, ci, co]
    # w3_ref   : (9, C) f32     conv3 weights,   w3r[t, ci]       = w3_hwio[dy, dx, ci, 0]
    # b1/b2    : (C, 1) f32     b3: (1, 1) f32 in SMEM
    # o_ref    : (1, TH, W)     lane-dense output row tile
    # pad_ref  : (H+6, W+2)     zero-padded full input image (filled once per batch element)
    # xq_ref   : (1, L0+2)      flattened padded input window for this tile (+1 slack each end)
    # col1_ref : (9, L1) f32    conv1 im2col
    # h1_ref   : (C, L1+2) f32  conv1 output (flattened, padded), +1 slack each end
    # col2_ref : (9C, L2) bf16  conv2 im2col (lane-dense, bf16 for the MXU)
    # h2_ref   : (C, L2+2) f32  conv2 output (flattened, padded), +1 slack each end
    Wp = W + 2
    L0 = (TH + 6) * Wp
    L1 = (TH + 4) * Wp
    L2 = (TH + 2) * Wp
    L3 = TH * Wp
    t = pl.program_id(1)
    r0 = t * TH                     # first output row of this tile

    # --- fill the full zero-padded input once per batch element ------------------------
    # The row-tile axis is the innermost grid axis and marked "arbitrary", so t == 0 always
    # runs before the other tiles of this batch element on the same core.  Invariant: only
    # the interior is ever written afterwards, the zero halo is never touched.
    @pl.when(t == 0)
    def _():
        pad_ref[...] = jnp.zeros_like(pad_ref)
        pad_ref[3:H + 3, 1:W + 1] = x_ref[0]

    # --- flatten this tile's (TH+6, Wp) padded-input window (1 slack element each end) ---
    zcol1 = jnp.zeros((1, 1), jnp.float32)
    xq_ref[:, 0:1] = zcol1
    xq_ref[:, L0 + 1:L0 + 2] = zcol1
    for i in range(TH + 6):
        xq_ref[:, 1 + i * Wp:1 + (i + 1) * Wp] = pad_ref[pl.ds(r0 + i, 1), :]

    pos1 = lax.broadcasted_iota(jnp.int32, (1, L1), 1)
    pos2 = pos1[:, :L2]
    cmask1 = cmask_ref[...] > 0.5          # (1, L1) valid-column mask
    cmask2 = cmask1[:, :L2]

    # --- conv1 (1 -> C): im2col (9, L1) then one K=9 f32 matmul -------------------------
    for tap, (dy, dx) in enumerate(_TAPS):
        off = dy * Wp + dx - 1
        col1_ref[tap:tap + 1, :] = xq_ref[:, 1 + off:1 + off + L1]
    h1v = jnp.dot(w1_ref[...], col1_ref[...],
                  preferred_element_type=jnp.float32) + b1_ref[...]
    valid1 = cmask1 & (pos1 >= (2 - r0) * Wp) & (pos1 < (H + 2 - r0) * Wp)
    h1v = jnp.where(valid1, jnp.maximum(h1v, 0.0), 0.0)
    zc = jnp.zeros((C, 1), jnp.float32)
    h1_ref[:, 0:1] = zc
    h1_ref[:, L1 + 1:L1 + 2] = zc
    h1_ref[:, 1:L1 + 1] = h1v

    # --- conv2 (C -> C): lane-dense bf16 im2col (9C, L2) + one K=9C MXU matmul ----------
    for tap, (dy, dx) in enumerate(_TAPS):
        off = dy * Wp + dx - 1
        col2_ref[tap * C:(tap + 1) * C, :] = (
            h1_ref[:, 1 + off:1 + off + L2].astype(jnp.bfloat16))
    h2v = jnp.dot(w2_ref[...], col2_ref[...],
                  preferred_element_type=jnp.float32) + b2_ref[...]
    valid2 = cmask2 & (pos2 >= (1 - r0) * Wp) & (pos2 < (H + 1 - r0) * Wp)
    h2v = jnp.where(valid2, jnp.maximum(h2v, 0.0), 0.0)
    h2_ref[:, 0:1] = zc
    h2_ref[:, L2 + 1:L2 + 2] = zc
    h2_ref[:, 1:L2 + 1] = h2v

    # --- conv3 (C -> 1): 9 accumulated f32 (1,C)@(C,L3) dots straight from h2_ref -------
    acc3 = jnp.zeros((1, L3), jnp.float32) + b3_ref[0, 0]
    for tap, (dy, dx) in enumerate(_TAPS):
        off = dy * Wp + dx - 1
        acc3 = acc3 + jnp.dot(w3_ref[tap:tap + 1, :],
                              h2_ref[:, 1 + off:1 + off + L3],
                              preferred_element_type=jnp.float32)

    # --- lane-dense (1, TH, W) store: strip the pad columns row by row -------------------
    for y in range(TH):
        o_ref[0, y:y + 1, :] = acc3[:, y * Wp + 1:y * Wp + 1 + W]


def _pick_tile_h(H):
    for th in (32, 16, 8):
        if H % th == 0:
            return th
    return H


def student_cascade(x_bhw, params, tile_h=None):
    """One StudentNet cascade. x_bhw: (B, H, W) f32 -> (B, H, W) f32."""
    B, H, W = x_bhw.shape
    C = params["w2"].shape[-1]
    TH = tile_h if tile_h is not None else _pick_tile_h(H)
    assert H % TH == 0, "H must be divisible by the row tile"
    assert TH == H or TH % 8 == 0, "row tile must be a multiple of 8 (or the full height)"
    Wp = W + 2
    L0 = (TH + 6) * Wp
    L1 = (TH + 4) * Wp
    L2 = (TH + 2) * Wp

    # Flatten HWIO weights to the kernel's channel-major layouts (constant-folded under jit).
    w1t = params["w1"].reshape(9, C).T.astype(jnp.float32)          # (C, 9)
    w2t = params["w2"].reshape(9 * C, C).T.astype(jnp.bfloat16)     # (C, 9C) bf16 (MXU)
    w3r = params["w3"].reshape(9, C).astype(jnp.float32)            # (9, C)
    b1 = params["b1"].reshape(C, 1).astype(jnp.float32)
    b2 = params["b2"].reshape(C, 1).astype(jnp.float32)
    b3 = params["b3"].reshape(1, 1).astype(jnp.float32)

    # Static valid-column mask (period Wp); the row validity is computed in-kernel from r0.
    pos = jnp.arange(L1, dtype=jnp.int32)
    colmask = (((pos % Wp) >= 1) & ((pos % Wp) <= W)).astype(jnp.float32).reshape(1, L1)

    scratch_bytes = ((H + 6) * Wp * 4 + (L0 + 2) * 4 + 9 * L1 * 4
                     + C * (L1 + 2) * 4 + 9 * C * L2 * 2 + C * (L2 + 2) * 4)
    block_bytes = 2 * (H * W * 4 + TH * W * 4) + L1 * 4 + 9 * C * C * 2 + 16 * C * 4
    vmem_limit = int(min(max(2 * (scratch_bytes + block_bytes), 16 * 2**20), 56 * 2**20))

    kernel = functools.partial(_student_kernel, H=H, W=W, C=C, TH=TH)
    return pl.pallas_call(
        kernel,
        out_shape=jax.ShapeDtypeStruct((B, H, W), jnp.float32),
        grid_spec=pltpu.PrefetchScalarGridSpec(
            num_scalar_prefetch=0,
            grid=(B, H // TH),
            in_specs=[
                pl.BlockSpec((1, H, W), lambda b, t: (b, 0, 0)),     # x (resident across t)
                pl.BlockSpec((1, L1), lambda b, t: (0, 0)),          # colmask
                pl.BlockSpec((C, 9), lambda b, t: (0, 0)),           # w1t
                pl.BlockSpec((C, 1), lambda b, t: (0, 0)),           # b1
                pl.BlockSpec((C, 9 * C), lambda b, t: (0, 0)),       # w2t (bf16)
                pl.BlockSpec((C, 1), lambda b, t: (0, 0)),           # b2
                pl.BlockSpec((9, C), lambda b, t: (0, 0)),           # w3r
                pl.BlockSpec(memory_space=pltpu.MemorySpace.SMEM),   # b3 scalar
            ],
            out_specs=pl.BlockSpec((1, TH, W), lambda b, t: (b, t, 0)),
            scratch_shapes=[
                pltpu.VMEM((H + 6, Wp), jnp.float32),        # padded full input
                pltpu.VMEM((1, L0 + 2), jnp.float32),        # flattened input window
                pltpu.VMEM((9, L1), jnp.float32),            # conv1 im2col
                pltpu.VMEM((C, L1 + 2), jnp.float32),        # h1
                pltpu.VMEM((9 * C, L2), jnp.bfloat16),       # conv2 im2col (bf16)
                pltpu.VMEM((C, L2 + 2), jnp.float32),        # h2
            ],
        ),
        compiler_params=pltpu.CompilerParams(
            # batch axis parallel (v7x megacore); row-tile axis must stay sequential because
            # the padded-input scratch is filled at t == 0 and reused by the later tiles.
            dimension_semantics=("parallel", "arbitrary"),
            vmem_limit_bytes=vmem_limit,
        ),
    )(x_bhw.astype(jnp.float32), colmask, w1t, b1, w2t, b2, w3r, b3)


# ---------------------------------------------------------------------------
# DataConsistencyLayer: Pallas elementwise mask/k-space combine; FFTs stay in JAX
# ---------------------------------------------------------------------------
def _dc_combine_kernel(kr_ref, ki_ref, mkr_ref, mki_ref, omm_ref, ur_ref, ui_ref):
    omm = omm_ref[...]
    ur_ref[...] = mkr_ref[...] + omm * kr_ref[...]
    ui_ref[...] = mki_ref[...] + omm * ki_ref[...]


def _pick_rows(n, target=512):
    if n <= target:
        return n
    for r in range(target - target % 8, 0, -8):
        if n % r == 0:
            return r
    return n


def _dc_combine(kr, ki, mk_r, mk_i, omm):
    B, H, W = kr.shape
    rows = B * H
    RB = _pick_rows(rows)                 # large row blocks: HBM-bandwidth bound op
    to2d = lambda a: a.reshape(rows, W)
    spec = pl.BlockSpec((RB, W), lambda i: (i, 0))
    ur, ui = pl.pallas_call(
        _dc_combine_kernel,
        out_shape=(jax.ShapeDtypeStruct((rows, W), jnp.float32),
                   jax.ShapeDtypeStruct((rows, W), jnp.float32)),
        grid_spec=pltpu.PrefetchScalarGridSpec(
            num_scalar_prefetch=0,
            grid=(rows // RB,),
            in_specs=[spec] * 5,
            out_specs=[spec, spec],
        ),
        compiler_params=pltpu.CompilerParams(dimension_semantics=("parallel",)),
    )(to2d(kr), to2d(ki), to2d(mk_r), to2d(mk_i), to2d(omm))
    return ur.reshape(B, H, W), ui.reshape(B, H, W)


def data_consistency(pred_bhw, mk_r, mk_i, one_minus_mask):
    """DC with pre-multiplied (loop-invariant) mask*kspace terms. (B,H,W) -> (B,H,W)."""
    # TODO(synk): fft2/ifft2 (complex, norm='ortho') have no Pallas equivalent on TPU.
    kpred = jnp.fft.fft2(pred_bhw.astype(jnp.complex64), norm="ortho")
    ur, ui = _dc_combine(jnp.real(kpred), jnp.imag(kpred), mk_r, mk_i, one_minus_mask)
    updated = jnp.fft.ifft2(lax.complex(ur, ui), norm="ortho")
    return jnp.real(updated).astype(jnp.float32)


def data_consistency_layer(predicted_img, us_kspace, us_mask):
    """Exact equivalent of the PyTorch DataConsistencyLayer.forward (NCHW inputs)."""
    B, C, H, W = predicted_img.shape
    mask = us_mask.reshape(B * C, H, W)
    mk_r = mask * us_kspace[..., 0].reshape(B * C, H, W)
    mk_i = mask * us_kspace[..., 1].reshape(B * C, H, W)
    out = data_consistency(predicted_img.reshape(B * C, H, W), mk_r, mk_i, 1.0 - mask)
    return out.reshape(B, C, H, W)


# ---------------------------------------------------------------------------
# IKD eval forward: 5x (student cascade -> data consistency)
# ---------------------------------------------------------------------------
def ikd_forward(x, x_k, us_mask, all_params, tile_h=None):
    B, C, H, W = x.shape  # C == 1
    cur = x.reshape(B * C, H, W)
    mask = us_mask.reshape(B * C, H, W)
    mk_r = mask * x_k[..., 0].reshape(B * C, H, W)   # loop-invariant: computed once
    mk_i = mask * x_k[..., 1].reshape(B * C, H, W)
    omm = 1.0 - mask
    for p in all_params:
        pred = student_cascade(cur, p, tile_h=tile_h)
        cur = data_consistency(pred, mk_r, mk_i, omm)
    return cur.reshape(B, C, H, W)


# ---------------------------------------------------------------------------
# Pure-JAX reference (for correctness check) and parameter init
# ---------------------------------------------------------------------------
def _student_cascade_ref(x_bhw, p):
    def conv(x, w, b, relu):
        y = lax.conv_general_dilated(x, w, (1, 1), "SAME",
                                     dimension_numbers=("NHWC", "HWIO", "NHWC"))
        y = y + b.reshape(1, 1, 1, -1)
        return jnp.maximum(y, 0.0) if relu else y
    h = conv(x_bhw[..., None], p["w1"], p["b1"], True)
    h = conv(h, p["w2"], p["b2"], True)
    h = conv(h, p["w3"], p["b3"], False)
    return h[..., 0]


def ikd_forward_ref(x, x_k, us_mask, all_params):
    B, C, H, W = x.shape
    cur = x.reshape(B * C, H, W)
    mask = us_mask.reshape(B * C, H, W)
    usk = lax.complex(x_k[..., 0].reshape(B * C, H, W), x_k[..., 1].reshape(B * C, H, W))
    for p in all_params:
        pred = _student_cascade_ref(cur, p)
        k = jnp.fft.fft2(pred.astype(jnp.complex64), norm="ortho")
        upd = mask * usk + (1.0 - mask) * k
        cur = jnp.real(jnp.fft.ifft2(upd, norm="ortho")).astype(jnp.float32)
    return cur.reshape(B, C, H, W)


def init_student_params(key, C=32):
    """PyTorch-style init; weights kept in HWIO (3,3,Cin,Cout)."""
    def conv_init(k, cin, cout):
        kw, kb = jax.random.split(k)
        bound = 1.0 / ((cin * 9) ** 0.5)
        w_oihw = jax.random.uniform(kw, (cout, cin, 3, 3), jnp.float32, -bound, bound)
        b = jax.random.uniform(kb, (cout,), jnp.float32, -bound, bound)
        return jnp.transpose(w_oihw, (2, 3, 1, 0)), b
    k1, k2, k3 = jax.random.split(key, 3)
    w1, b1 = conv_init(k1, 1, C)
    w2, b2 = conv_init(k2, C, C)
    w3, b3 = conv_init(k3, C, 1)
    return {"w1": w1, "b1": b1, "w2": w2, "b2": b2, "w3": w3, "b3": b3}


if __name__ == "__main__":
    key = jax.random.PRNGKey(0)
    B, C, H, W = 2, 1, 16, 16

    k_x, k_k, k_m, k_p = jax.random.split(key, 4)
    x = jax.random.normal(k_x, (B, C, H, W), jnp.float32)
    x_k = jax.random.normal(k_k, (B, C, H, W, 2), jnp.float32)
    us_mask = (jax.random.uniform(k_m, (B, C, H, W)) > 0.5).astype(jnp.float32)
    all_params = [init_student_params(k) for k in jax.random.split(k_p, 5)]

    # Standalone DataConsistencyLayer (the spec module): exact f32 check.
    dc_out = jax.block_until_ready(jax.jit(data_consistency_layer)(x, x_k, us_mask))
    kx = jnp.fft.fft2(x.astype(jnp.complex64), norm="ortho")
    usk = lax.complex(x_k[..., 0], x_k[..., 1])
    dc_ref = jnp.real(jnp.fft.ifft2(us_mask * usk + (1.0 - us_mask) * kx, norm="ortho"))
    assert dc_out.shape == (B, C, H, W) and dc_out.dtype == jnp.float32
    assert jnp.allclose(dc_out, dc_ref.astype(jnp.float32), atol=1e-5, rtol=1e-5)

    # Full IKD eval forward (5 fused-cascade kernels + 5 DC layers).
    # tile_h=8 gives 2 row tiles per 16-row image, exercising the halo / row-tile path.
    fwd = jax.jit(functools.partial(ikd_forward, tile_h=8))
    out = jax.block_until_ready(fwd(x, x_k, us_mask, all_params))
    ref = ikd_forward_ref(x, x_k, us_mask, all_params)
    assert out.shape == (B, C, H, W) and out.dtype == jnp.float32
    assert bool(jnp.all(jnp.isfinite(out)))
    err = float(jnp.max(jnp.abs(out - ref)))
    assert jnp.allclose(out, ref, atol=2e-2, rtol=2e-2), err

    print("KERNEL_OK")
</pallas_src>

<mosaic_0001>
module attributes {stable_mosaic.version = 11 : i64} {
  func.func @_dc_combine_kernel(%arg0: i32, %arg1: memref<32x16xf32, #tpu.memory_space<vmem>>, %arg2: memref<32x16xf32, #tpu.memory_space<vmem>>, %arg3: memref<32x16xf32, #tpu.memory_space<vmem>>, %arg4: memref<32x16xf32, #tpu.memory_space<vmem>>, %arg5: memref<32x16xf32, #tpu.memory_space<vmem>>, %arg6: memref<32x16xf32, #tpu.memory_space<vmem>>, %arg7: memref<32x16xf32, #tpu.memory_space<vmem>>) attributes {dimension_semantics = [#tpu.dimension_semantics<parallel>], iteration_bounds = array<i64: 1>, scalar_prefetch = 0 : i64, scratch_operands = 0 : i64, tpu.core_type = #tpu.core_type<tc>, window_params = [{transform_indices = @transform_0, window_bounds = array<i64: 32, 16>}, {transform_indices = @transform_1, window_bounds = array<i64: 32, 16>}, {transform_indices = @transform_2, window_bounds = array<i64: 32, 16>}, {transform_indices = @transform_3, window_bounds = array<i64: 32, 16>}, {transform_indices = @transform_4, window_bounds = array<i64: 32, 16>}, {transform_indices = @transform_5, window_bounds = array<i64: 32, 16>}, {transform_indices = @transform_6, window_bounds = array<i64: 32, 16>}]} {
    %c0 = arith.constant 0 : index
    %c0_0 = arith.constant 0 : index
    %0 = vector.load %arg5[%c0, %c0_0] : memref<32x16xf32, #tpu.memory_space<vmem>>, vector<32x16xf32>
    %c0_1 = arith.constant 0 : index
    %c0_2 = arith.constant 0 : index
    %1 = vector.load %arg3[%c0_1, %c0_2] : memref<32x16xf32, #tpu.memory_space<vmem>>, vector<32x16xf32>
    %c0_3 = arith.constant 0 : index
    %c0_4 = arith.constant 0 : index
    %2 = vector.load %arg1[%c0_3, %c0_4] : memref<32x16xf32, #tpu.memory_space<vmem>>, vector<32x16xf32>
    %3 = arith.mulf %0, %2 : vector<32x16xf32>
    %4 = arith.addf %1, %3 : vector<32x16xf32>
    %c0_5 = arith.constant 0 : index
    %c0_6 = arith.constant 0 : index
    %5 = vector.load %arg6[%c0_5, %c0_6] : memref<32x16xf32, #tpu.memory_space<vmem>>, vector<32x16xf32>
    tpu.vector_store %arg6[%c0_5, %c0_6], %4 {strides = array<i32>} : memref<32x16xf32, #tpu.memory_space<vmem>>, vector<32x16xf32>,
    %c0_7 = arith.constant 0 : index
    %c0_8 = arith.constant 0 : index
    %6 = vector.load %arg4[%c0_7, %c0_8] : memref<32x16xf32, #tpu.memory_space<vmem>>, vector<32x16xf32>
    %c0_9 = arith.constant 0 : index
    %c0_10 = arith.constant 0 : index
    %7 = vector.load %arg2[%c0_9, %c0_10] : memref<32x16xf32, #tpu.memory_space<vmem>>, vector<32x16xf32>
    %8 = arith.mulf %0, %7 : vector<32x16xf32>
    %9 = arith.addf %6, %8 : vector<32x16xf32>
    %c0_11 = arith.constant 0 : index
    %c0_12 = arith.constant 0 : index
    %10 = vector.load %arg7[%c0_11, %c0_12] : memref<32x16xf32, #tpu.memory_space<vmem>>, vector<32x16xf32>
    tpu.vector_store %arg7[%c0_11, %c0_12], %9 {strides = array<i32>} : memref<32x16xf32, #tpu.memory_space<vmem>>, vector<32x16xf32>,
    return
  }
  func.func @transform_0(%arg0: i32) -> (i32, i32) {
    %c0_i32 = arith.constant 0 : i32
    %c0_i32_0 = arith.constant 0 : i32
    return %arg0, %c0_i32 : i32, i32
  }
  func.func @transform_1(%arg0: i32) -> (i32, i32) {
    %c0_i32 = arith.constant 0 : i32
    %c0_i32_0 = arith.constant 0 : i32
    return %arg0, %c0_i32 : i32, i32
  }
  func.func @transform_2(%arg0: i32) -> (i32, i32) {
    %c0_i32 = arith.constant 0 : i32
    %c0_i32_0 = arith.constant 0 : i32
    return %arg0, %c0_i32 : i32, i32
  }
  func.func @transform_3(%arg0: i32) -> (i32, i32) {
    %c0_i32 = arith.constant 0 : i32
    %c0_i32_0 = arith.constant 0 : i32
    return %arg0, %c0_i32 : i32, i32
  }
  func.func @transform_4(%arg0: i32) -> (i32, i32) {
    %c0_i32 = arith.constant 0 : i32
    %c0_i32_0 = arith.constant 0 : i32
    return %arg0, %c0_i32 : i32, i32
  }
  func.func @transform_5(%arg0: i32) -> (i32, i32) {
    %c0_i32 = arith.constant 0 : i32
    %c0_i32_0 = arith.constant 0 : i32
    return %arg0, %c0_i32 : i32, i32
  }
  func.func @transform_6(%arg0: i32) -> (i32, i32) {
    %c0_i32 = arith.constant 0 : i32
    %c0_i32_0 = arith.constant 0 : i32
    return %arg0, %c0_i32 : i32, i32
  }
}

</mosaic_0001>

<llo_original>
// kernel: data_consistency_layer.1
$region0: #{data_consistency_layer.1}
  #allocation0 [shape = 'u32[]', space=smem, size = 0x4, offset = 0x4, fixed_abs, tag = 'smem constant byte address 0x4 - core index']
  #allocation1 [shape = 'u32[72,128]{1,0:T(1,128)}', space=vmem, size = 0x9000, scoped, tag = 'internal scratch']
  %s0 = inlined_call_operand.vmem [shape: f32[32,16], index: 0, kind: input, shape index: {}]
  %s1 = inlined_call_operand.vmem [shape: f32[32,16], index: 1, kind: input, shape index: {}]
  %s2 = inlined_call_operand.vmem [shape: f32[32,16], index: 2, kind: input, shape index: {}]
  %s3 = inlined_call_operand.vmem [shape: f32[32,16], index: 3, kind: input, shape index: {}]
  %s4 = inlined_call_operand.vmem [shape: f32[32,16], index: 4, kind: input, shape index: {}]
  %s5 = inlined_call_operand.vmem [shape: f32[32,16], index: 5, kind: output, shape index: {0}]
  %s6 = inlined_call_operand.vmem [shape: f32[32,16], index: 6, kind: output, shape index: {1}]
  %7 = xla_tuple %s5, %s6
  %s8 = sld [smem:[#allocation0]]
  $region38: #{data_consistency_layer.1} parent=0
    _
  %s10 = ssub.s32 1, %s8
  %s11 = scalar_select 0, %s10, %s8
  // Predicated region
  $region2: #{data_consistency_layer.1} parent=0 // pred_check
    _
  $region3: #{data_consistency_layer.1} parent=0 // pred_check_branch
    %13 = sbr.rel (0) target = $region5
  $region4: #{data_consistency_layer.1} parent=0 // pred_region
    _
  $region5: #{data_consistency_layer.1} parent=0 // pred_fallthru
    _
  // Predicated region
  $region6: #{data_consistency_layer.1} parent=0 // pred_check
    _
  $region7: #{data_consistency_layer.1} parent=0 // pred_check_branch
    %15 = sbr.rel (0) target = $region9
  $region8: #{data_consistency_layer.1} parent=0 // pred_region
    _
  $region9: #{data_consistency_layer.1} parent=0 // pred_fallthru
    _
  // Predicated region
  $region10: #{data_consistency_layer.1} parent=0 // pred_check
    _
  $region11: #{data_consistency_layer.1} parent=0 // pred_check_branch
    %17 = sbr.rel (0) target = $region13
  $region12: #{data_consistency_layer.1} parent=0 // pred_region
    _
  $region13: #{data_consistency_layer.1} parent=0 // pred_fallthru
    _
  // Predicated region
  $region14: #{data_consistency_layer.1} parent=0 // pred_check
    _
  $region15: #{data_consistency_layer.1} parent=0 // pred_check_branch
    %19 = sbr.rel (0) target = $region17
  $region16: #{data_consistency_layer.1} parent=0 // pred_region
    _
  $region17: #{data_consistency_layer.1} parent=0 // pred_fallthru
    _
  // Predicated region
  $region18: #{data_consistency_layer.1} parent=0 // pred_check
    _
  $region19: #{data_consistency_layer.1} parent=0 // pred_check_branch
    %21 = sbr.rel (0) target = $region21
  $region20: #{data_consistency_layer.1} parent=0 // pred_region
    _
  $region21: #{data_consistency_layer.1} parent=0 // pred_fallthru
    _
  %v22 = vld [vmem:[%s4] sm:$0xff]
  %v23 = vld [vmem:[%s4 + $0x8] sm:$0xff]
  %v24 = vld [vmem:[%s4 + $0x10] sm:$0xff]
  %v25 = vld [vmem:[%s4 + $0x18] sm:$0xff]
  %v26 = vld [vmem:[%s2] sm:$0xff]
  %v27 = vld [vmem:[%s2 + $0x8] sm:$0xff]
  %v28 = vld [vmem:[%s2 + $0x10] sm:$0xff]
  %v29 = vld [vmem:[%s2 + $0x18] sm:$0xff]
  %v30 = vld [vmem:[%s0] sm:$0xff]
  %v31 = vld [vmem:[%s0 + $0x8] sm:$0xff]
  %v32 = vld [vmem:[%s0 + $0x10] sm:$0xff]
  %v33 = vld [vmem:[%s0 + $0x18] sm:$0xff]
  %v34 = vmul.f32 %v22, %v30
  %v35 = vmul.f32 %v23, %v31
  %v36 = vmul.f32 %v24, %v32
  %v37 = vmul.f32 %v25, %v33
  %v38 = vadd.f32 %v26, %v34
  %v39 = vadd.f32 %v27, %v35
  %v40 = vadd.f32 %v28, %v36
  %v41 = vadd.f32 %v29, %v37
  %vm42 = vcmask 130048
  %43 = vst.msk [vmem:[%s5] sm:$0xff] %vm42, %v38
  %44 = vst.msk [vmem:[%s5 + $0x8] sm:$0xff] %vm42, %v39
  %45 = vst.msk [vmem:[%s5 + $0x10] sm:$0xff] %vm42, %v40
  %46 = vst.msk [vmem:[%s5 + $0x18] sm:$0xff] %vm42, %v41
  %v47 = vld [vmem:[%s3] sm:$0xff]
  %v48 = vld [vmem:[%s3 + $0x8] sm:$0xff]
  %v49 = vld [vmem:[%s3 + $0x10] sm:$0xff]
  %v50 = vld [vmem:[%s3 + $0x18] sm:$0xff]
  %v51 = vld [vmem:[%s1] sm:$0xff]
  %v52 = vld [vmem:[%s1 + $0x8] sm:$0xff]
  %v53 = vld [vmem:[%s1 + $0x10] sm:$0xff]
  %v54 = vld [vmem:[%s1 + $0x18] sm:$0xff]
  %v55 = vmul.f32 %v22, %v51
  %v56 = vmul.f32 %v23, %v52
  %v57 = vmul.f32 %v24, %v53
  %v58 = vmul.f32 %v25, %v54
  %v59 = vadd.f32 %v47, %v55
  %v60 = vadd.f32 %v48, %v56
  %v61 = vadd.f32 %v49, %v57
  %v62 = vadd.f32 %v50, %v58
  %63 = vst.msk [vmem:[%s6] sm:$0xff] %vm42, %v59
  %64 = vst.msk [vmem:[%s6 + $0x8] sm:$0xff] %vm42, %v60
  %65 = vst.msk [vmem:[%s6 + $0x10] sm:$0xff] %vm42, %v61
  %66 = vst.msk [vmem:[%s6 + $0x18] sm:$0xff] %vm42, %v62
  // Predicated region
  $region22: #{data_consistency_layer.1} parent=0 // pred_check
    _
  $region23: #{data_consistency_layer.1} parent=0 // pred_check_branch
    %68 = sbr.rel (0) target = $region25
  $region24: #{data_consistency_layer.1} parent=0 // pred_region
    _
  $region25: #{data_consistency_layer.1} parent=0 // pred_fallthru
    _
  // Predicated region
  $region26: #{data_consistency_layer.1} parent=0 // pred_check
    _
  $region27: #{data_consistency_layer.1} parent=0 // pred_check_branch
    %70 = sbr.rel (0) target = $region29
  $region28: #{data_consistency_layer.1} parent=0 // pred_region
    _
  $region29: #{data_consistency_layer.1} parent=0 // pred_fallthru
    _
  // Predicated region
  $region30: #{data_consistency_layer.1} parent=0 // pred_check
    _
  $region31: #{data_consistency_layer.1} parent=0 // pred_check_branch
    %72 = sbr.rel (0) target = $region33
  $region32: #{data_consistency_layer.1} parent=0 // pred_region
    _
  $region33: #{data_consistency_layer.1} parent=0 // pred_fallthru
    _
  // Predicated region
  $region34: #{data_consistency_layer.1} parent=0 // pred_check
    _
  $region35: #{data_consistency_layer.1} parent=0 // pred_check_branch
    %74 = sbr.rel (0) target = $region37
  $region36: #{data_consistency_layer.1} parent=0 // pred_region
    _
  $region37: #{data_consistency_layer.1} parent=0 // pred_fallthru
    _

</llo_original>
